<compile_context>
chip_gen: v7x
topology: tpu7x:2x2x1
jax: 0.10.0
libtpu: 0.0.40
codegen_flags: <defaults>
</compile_context>

<pallas_src>
import numpy as np

import jax
import jax.numpy as jnp
from jax import lax
from jax.experimental import pallas as pl
from jax.experimental.pallas import tpu as pltpu


def _round_up(x, m):
    return ((x + m - 1) // m) * m


def _lstm_chunk_kernel(nsteps_ref, xg_ref, whh_ref, lensm1_ref, h0_ref, o_ref,
                       h_scr, c_scr, out_scr):
    """One (context-block, T-chunk) grid step of the C-folded LSTM recurrence.

    nsteps_ref : SMEM (1,) int32         -- max sequence length (early exit)
    xg_ref     : VMEM (Tc, Bp, Gp) bf16  -- x @ W_ih^T + bias for this chunk
    whh_ref    : VMEM (H, Gp) bf16       -- recurrent weights, transposed, packed gates
    lensm1_ref : VMEM (Rb, 1) int32      -- per-row (len - 1); padded rows = -1
    h0_ref     : VMEM (Rb, H) f32        -- h0 = c0 = context feature
    o_ref      : VMEM (Rb, H) f32        -- last valid hidden state per row
    h_scr/c_scr/out_scr : VMEM (Rb, H) f32 scratch persisting across chunks
    """
    Tc, Bp, Gp = xg_ref.shape
    Rb, H = h_scr.shape
    Cb = Rb // Bp                           # contexts folded into this block

    chunk = pl.program_id(1)

    @pl.when(chunk == 0)
    def _init():
        h_scr[...] = h0_ref[...]
        c_scr[...] = h0_ref[...]
        out_scr[...] = jnp.zeros_like(out_scr)

    lens_m1 = lensm1_ref[...]               # (Rb, 1) int32 (hoisted -1)
    whh = whh_ref[...]                      # (H, Gp) bf16
    t0 = chunk * Tc
    # Only run timesteps below max(len); later steps cannot change the output.
    n_valid = jnp.clip(nsteps_ref[0] - t0, 0, Tc)

    def step(t, carry):
        h, c, out = carry
        xg_t = xg_ref[t].astype(jnp.float32)                      # (Bp, Gp)
        # Broadcast the context-independent input projection over the folded
        # contexts (replicated in vregs, NOT in HBM).  Cb is static.
        if Cb > 1:
            xg_rows = jnp.concatenate([xg_t] * Cb, axis=0)        # (Rb, Gp)
        else:
            xg_rows = xg_t
        gates = xg_rows + jnp.dot(h.astype(jnp.bfloat16), whh,
                                  preferred_element_type=jnp.float32)  # (Rb, Gp)
        # Packed gate order (i, f, g, o), each H lanes wide.
        i_g = jax.nn.sigmoid(gates[:, 0 * H:1 * H])
        f_g = jax.nn.sigmoid(gates[:, 1 * H:2 * H])
        g_g = jnp.tanh(gates[:, 2 * H:3 * H])
        o_g = jax.nn.sigmoid(gates[:, 3 * H:4 * H])
        c_new = f_g * c + i_g * g_g
        h_new = o_g * jnp.tanh(c_new)
        # Capture h at the last valid timestep (rnn_out[arange(B), len-1]).
        out = jnp.where(lens_m1 == (t0 + t), h_new, out)
        return h_new, c_new, out

    carry0 = (h_scr[...], c_scr[...], out_scr[...])
    h, c, out = lax.fori_loop(0, n_valid, step, carry0)
    h_scr[...] = h
    c_scr[...] = c
    out_scr[...] = out

    @pl.when(chunk == pl.num_programs(1) - 1)
    def _finalize():
        o_ref[...] = out_scr[...].astype(o_ref.dtype)   # single store at the end


def language_encoder_forward(padded_tokens, init_feats, params, *, t_chunk=128):
    """Returns a list of length C with arrays of shape (B, H)."""
    B, T, E = padded_tokens.shape
    _, C, H = init_feats.shape

    G = 4 * H
    Gp = _round_up(G, 128)                       # packed gates padded to full lanes
    Bp = _round_up(B, 8)                         # sublane-align the batch fold
    NC_BLK = 2 if (C >= 2 and C % 2 == 0) else 1 # megacore split over contexts
    Cb = C // NC_BLK                             # contexts folded per block
    Rb = Cb * Bp                                 # rows per context block
    Rp = NC_BLK * Rb

    Tc = int(min(t_chunk, T))                    # T-chunk size (pipelined axis)
    n_chunks = -(-T // Tc)
    Tpad = n_chunks * Tc

    x = padded_tokens.astype(jnp.float32)
    init = init_feats.astype(jnp.float32)

    # --- sequence lengths (PyTorch: (padded_tokens != padding_idx).sum(dim=1)[:, 0]) ---
    lens = jnp.sum((x[:, :, 0] != 0.0).astype(jnp.int32), axis=1)        # (B,)
    nsteps = jnp.max(lens).astype(jnp.int32).reshape(1)                  # (1,) SMEM
    lens_m1 = jnp.full((Bp,), -1, jnp.int32).at[:B].set(lens - 1)        # pad rows never match
    lens_m1_r = jnp.tile(lens_m1, (C,)).reshape(Rp, 1)                   # row = c*Bp + b

    # --- weights in packed-gate layout (i|f|g|o contiguous), padded to Gp lanes ---
    w_ih = params["w_ih"].astype(jnp.float32)                            # (4H, E)
    w_hh = params["w_hh"].astype(jnp.float32)                            # (4H, H)
    bias = (params["b_ih"] + params["b_hh"]).astype(jnp.float32)         # (4H,)
    w_ih_p = jnp.zeros((Gp, E), jnp.float32).at[:G, :].set(w_ih)
    whh_t = jnp.zeros((H, Gp), jnp.float32).at[:, :G].set(w_hh.T).astype(jnp.bfloat16)
    bias_p = jnp.zeros((Gp,), jnp.float32).at[:G].set(bias)

    # --- hoisted context-independent input projection, built directly in (T, B, G) ---
    xg = jnp.einsum("bte,ge->tbg", x, w_ih_p) + bias_p                   # (T, B, Gp) f32
    xg = jnp.pad(xg, ((0, Tpad - T), (0, Bp - B), (0, 0)))
    xg = xg.astype(jnp.bfloat16)                                         # halve HBM traffic

    # --- h0 = c0 = init_feats, context-major rows (c * Bp + b) ---
    h0 = jnp.transpose(init, (1, 0, 2))                                  # (C, B, H)
    h0 = jnp.pad(h0, ((0, 0), (0, Bp - B), (0, 0))).reshape(Rp, H)       # (Rp, H)

    # explicit VMEM budget (double-buffered xg chunk dominates)
    vmem_est = (2 * Tc * Bp * Gp * 2                    # xg chunk, 2 buffers, bf16
                + 2 * _round_up(H, 8) * Gp * 2          # whh (bf16)
                + 9 * _round_up(Rb, 8) * 128 * 4)       # lens/h0/out blocks + scratch
    vmem_limit = int(min(max(4 * vmem_est, 32 << 20), 100 << 20))

    out = pl.pallas_call(
        _lstm_chunk_kernel,
        out_shape=jax.ShapeDtypeStruct((Rp, H), jnp.float32),
        grid_spec=pltpu.PrefetchScalarGridSpec(
            num_scalar_prefetch=1,
            grid=(NC_BLK, n_chunks),
            in_specs=[
                pl.BlockSpec((Tc, Bp, Gp), lambda cb, t, n: (t, 0, 0)),   # streamed xg
                pl.BlockSpec((H, Gp), lambda cb, t, n: (0, 0)),           # W_hh^T (bf16)
                pl.BlockSpec((Rb, 1), lambda cb, t, n: (cb, 0)),          # len - 1
                pl.BlockSpec((Rb, H), lambda cb, t, n: (cb, 0)),          # h0
            ],
            out_specs=pl.BlockSpec((Rb, H), lambda cb, t, n: (cb, 0)),
            scratch_shapes=[
                pltpu.VMEM((Rb, H), jnp.float32),   # h  (persists across chunks)
                pltpu.VMEM((Rb, H), jnp.float32),   # c
                pltpu.VMEM((Rb, H), jnp.float32),   # last valid hidden accumulator
            ],
        ),
        compiler_params=pltpu.CompilerParams(
            dimension_semantics=("parallel", "arbitrary"),
            vmem_limit_bytes=vmem_limit),
    )(nsteps, xg, whh_t, lens_m1_r, h0)

    out = out.reshape(C, Bp, H)[:, :B, :]                                # strip pad
    return [out[i] for i in range(C)]


def _lstm_ref(x, h0, params):
    """Pure-JAX f32 reference LSTM (batch_first), returns all hidden states (B, T, H)."""
    w_ih, w_hh = params["w_ih"], params["w_hh"]
    b = params["b_ih"] + params["b_hh"]
    H = h0.shape[-1]

    def step(carry, x_t):
        h, c = carry
        gates = x_t @ w_ih.T + h @ w_hh.T + b
        i = jax.nn.sigmoid(gates[:, :H])
        f = jax.nn.sigmoid(gates[:, H:2 * H])
        g = jnp.tanh(gates[:, 2 * H:3 * H])
        o = jax.nn.sigmoid(gates[:, 3 * H:])
        c = f * c + i * g
        h = o * jnp.tanh(c)
        return (h, c), h

    (_, _), hs = lax.scan(step, (h0, h0), jnp.transpose(x, (1, 0, 2)))
    return jnp.transpose(hs, (1, 0, 2))


if __name__ == "__main__":
    B, T, E, H, C = 2, 8, 32, 32, 4

    key = jax.random.PRNGKey(0)
    k1, k2, k3, k4, k5, k6 = jax.random.split(key, 6)

    # padded token embeddings: sequence lengths [8, 3]; padding positions exactly 0
    seq_lens = jnp.array([T, 3], dtype=jnp.int32)
    tokens = jax.random.normal(k1, (B, T, E), dtype=jnp.float32)
    valid = jnp.arange(T)[None, :, None] < seq_lens[:, None, None]
    padded_tokens = jnp.where(valid, tokens, 0.0)

    init_feats = jax.random.normal(k2, (B, C, H), dtype=jnp.float32)

    # nn.LSTM default init: U(-1/sqrt(H), 1/sqrt(H)), gate order (i, f, g, o)
    bound = float(1.0 / (H ** 0.5))
    params = {
        "w_ih": jax.random.uniform(k3, (4 * H, E), minval=-bound, maxval=bound,
                                   dtype=jnp.float32),
        "w_hh": jax.random.uniform(k4, (4 * H, H), minval=-bound, maxval=bound,
                                   dtype=jnp.float32),
        "b_ih": jax.random.uniform(k5, (4 * H,), minval=-bound, maxval=bound,
                                   dtype=jnp.float32),
        "b_hh": jax.random.uniform(k6, (4 * H,), minval=-bound, maxval=bound,
                                   dtype=jnp.float32),
    }

    # t_chunk=4 -> 2 chunks: exercises the pipelined grid, cross-chunk state
    # carry, and an early (frozen) last-valid gather for the length-3 row.
    res = language_encoder_forward(padded_tokens, init_feats, params, t_chunk=4)
    res = [jax.block_until_ready(r) for r in res]

    # correctness check against a pure-JAX f32 reference
    # (bf16 input projection + bf16 recurrent dot with f32 accumulation)
    for i in range(C):
        hs = _lstm_ref(padded_tokens, init_feats[:, i], params)
        ref_i = hs[jnp.arange(B), seq_lens - 1]
        np.testing.assert_allclose(np.asarray(res[i]), np.asarray(ref_i),
                                   rtol=3e-2, atol=3e-2)

    print("KERNEL_OK")
</pallas_src>

<mosaic_0001>
module attributes {stable_mosaic.version = 11 : i64} {
  func.func @_lstm_chunk_kernel(%arg0: i32, %arg1: i32, %arg2: memref<1xi32, #tpu.memory_space<smem>>, %arg3: memref<4x8x128xbf16, #tpu.memory_space<vmem>>, %arg4: memref<32x128xbf16, #tpu.memory_space<vmem>>, %arg5: memref<16x1xi32, #tpu.memory_space<vmem>>, %arg6: memref<16x32xf32, #tpu.memory_space<vmem>>, %arg7: memref<16x32xf32, #tpu.memory_space<vmem>>, %arg8: memref<16x32xf32, #tpu.memory_space<vmem>>, %arg9: memref<16x32xf32, #tpu.memory_space<vmem>>, %arg10: memref<16x32xf32, #tpu.memory_space<vmem>>) attributes {dimension_semantics = [#tpu.dimension_semantics<parallel>, #tpu.dimension_semantics<arbitrary>], iteration_bounds = array<i64: 2, 2>, scalar_prefetch = 1 : i64, scratch_operands = 3 : i64, tpu.core_type = #tpu.core_type<tc>, window_params = [{transform_indices = @transform_0, window_bounds = array<i64: 4, 8, 128>}, {pipeline_mode = #tpu.pipeline_mode<synchronous>, transform_indices = @transform_1, window_bounds = array<i64: 32, 128>}, {transform_indices = @transform_2, window_bounds = array<i64: 16, 1>}, {transform_indices = @transform_3, window_bounds = array<i64: 16, 32>}, {transform_indices = @transform_4, window_bounds = array<i64: 16, 32>}]} {
    %c0_i32 = arith.constant 0 : i32
    %0 = arith.cmpi eq, %arg1, %c0_i32 : i32
    %1 = arith.extui %0 : i1 to i32
    %c0_i32_0 = arith.constant 0 : i32
    %2 = arith.cmpi ne, %1, %c0_i32_0 : i32
    scf.if %2 {
      %c0_22 = arith.constant 0 : index
      %c0_23 = arith.constant 0 : index
      %22 = vector.load %arg6[%c0_22, %c0_23] : memref<16x32xf32, #tpu.memory_space<vmem>>, vector<16x32xf32>
      %c0_24 = arith.constant 0 : index
      %c0_25 = arith.constant 0 : index
      %23 = vector.load %arg8[%c0_24, %c0_25] : memref<16x32xf32, #tpu.memory_space<vmem>>, vector<16x32xf32>
      tpu.vector_store %arg8[%c0_24, %c0_25], %22 {strides = array<i32>} : memref<16x32xf32, #tpu.memory_space<vmem>>, vector<16x32xf32>,
      %c0_26 = arith.constant 0 : index
      %c0_27 = arith.constant 0 : index
      %24 = vector.load %arg6[%c0_26, %c0_27] : memref<16x32xf32, #tpu.memory_space<vmem>>, vector<16x32xf32>
      %c0_28 = arith.constant 0 : index
      %c0_29 = arith.constant 0 : index
      %25 = vector.load %arg9[%c0_28, %c0_29] : memref<16x32xf32, #tpu.memory_space<vmem>>, vector<16x32xf32>
      tpu.vector_store %arg9[%c0_28, %c0_29], %24 {strides = array<i32>} : memref<16x32xf32, #tpu.memory_space<vmem>>, vector<16x32xf32>,
      %cst = arith.constant 0.000000e+00 : f32
      %26 = vector.broadcast %cst : f32 to vector<16x32xf32>
      %c0_30 = arith.constant 0 : index
      %c0_31 = arith.constant 0 : index
      %27 = vector.load %arg10[%c0_30, %c0_31] : memref<16x32xf32, #tpu.memory_space<vmem>>, vector<16x32xf32>
      tpu.vector_store %arg10[%c0_30, %c0_31], %26 {strides = array<i32>} : memref<16x32xf32, #tpu.memory_space<vmem>>, vector<16x32xf32>,
    } else {
    }
    %c0 = arith.constant 0 : index
    %c0_1 = arith.constant 0 : index
    %3 = vector.load %arg5[%c0, %c0_1] : memref<16x1xi32, #tpu.memory_space<vmem>>, vector<16x1xi32>
    %c0_2 = arith.constant 0 : index
    %c0_3 = arith.constant 0 : index
    %4 = vector.load %arg4[%c0_2, %c0_3] : memref<32x128xbf16, #tpu.memory_space<vmem>>, vector<32x128xbf16>
    %c4_i32 = arith.constant 4 : i32
    %5 = arith.muli %arg1, %c4_i32 : i32
    %c0_4 = arith.constant 0 : index
    %6 = memref.load %arg2[%c0_4] : memref<1xi32, #tpu.memory_space<smem>>
    %7 = arith.subi %6, %5 : i32
    %c0_i32_5 = arith.constant 0 : i32
    %c4_i32_6 = arith.constant 4 : i32
    %8 = arith.maxsi %c0_i32_5, %7 : i32
    %9 = arith.minsi %c4_i32_6, %8 : i32
    %c0_7 = arith.constant 0 : index
    %c0_8 = arith.constant 0 : index
    %10 = vector.load %arg8[%c0_7, %c0_8] : memref<16x32xf32, #tpu.memory_space<vmem>>, vector<16x32xf32>
    %c0_9 = arith.constant 0 : index
    %c0_10 = arith.constant 0 : index
    %11 = vector.load %arg9[%c0_9, %c0_10] : memref<16x32xf32, #tpu.memory_space<vmem>>, vector<16x32xf32>
    %c0_11 = arith.constant 0 : index
    %c0_12 = arith.constant 0 : index
    %12 = vector.load %arg10[%c0_11, %c0_12] : memref<16x32xf32, #tpu.memory_space<vmem>>, vector<16x32xf32>
    %c0_i32_13 = arith.constant 0 : i32
    %13 = arith.subi %9, %c0_i32_13 : i32
    %14 = arith.addi %c0_i32_13, %13 : i32
    %c1_i32 = arith.constant 1 : i32
    %15:3 = scf.for %arg11 = %c0_i32_13 to %14 step %c1_i32 iter_args(%arg12 = %10, %arg13 = %11, %arg14 = %12) -> (vector<16x32xf32>, vector<16x32xf32>, vector<16x32xf32>)  : i32 {
      %22 = arith.index_cast %arg11 : i32 to index
      %c0_22 = arith.constant 0 : index
      %c0_23 = arith.constant 0 : index
      %23 = vector.load %arg3[%22, %c0_22, %c0_23] : memref<4x8x128xbf16, #tpu.memory_space<vmem>>, vector<1x8x128xbf16>
      %24 = vector.shape_cast %23 : vector<1x8x128xbf16> to vector<8x128xbf16>
      %25 = arith.extf %24 : vector<8x128xbf16> to vector<8x128xf32>
      %26 = tpu.concatenate %25, %25 in 0 : vector<8x128xf32>, vector<8x128xf32> -> vector<16x128xf32>
      %27 = arith.truncf %arg12 : vector<16x32xf32> to vector<16x32xbf16>
      %cst = arith.constant dense<0.000000e+00> : vector<16x128xf32>
      %28 = tpu.matmul %27, %4, %cst {dimension_numbers = #tpu.dot_dimension_numbers<[1], [0], [0], [1], [0, 0, 1, 1], [], []>} : vector<16x32xbf16>, vector<32x128xbf16>, vector<16x128xf32> -> vector<16x128xf32>
      %29 = arith.addf %26, %28 : vector<16x128xf32>
      %30 = vector.extract_strided_slice %29 {offsets = [0, 0], sizes = [16, 32], strides = [1, 1]} : vector<16x128xf32> to vector<16x32xf32>
      %31 = arith.negf %30 : vector<16x32xf32>
      %32 = math.exp %31 : vector<16x32xf32>
      %cst_24 = arith.constant 1.000000e+00 : f32
      %33 = vector.broadcast %cst_24 : f32 to vector<16x32xf32>
      %34 = arith.addf %33, %32 : vector<16x32xf32>
      %35 = arith.divf %33, %34 : vector<16x32xf32>
      %36 = vector.extract_strided_slice %29 {offsets = [0, 32], sizes = [16, 32], strides = [1, 1]} : vector<16x128xf32> to vector<16x32xf32>
      %37 = arith.negf %36 : vector<16x32xf32>
      %38 = math.exp %37 : vector<16x32xf32>
      %cst_25 = arith.constant 1.000000e+00 : f32
      %39 = vector.broadcast %cst_25 : f32 to vector<16x32xf32>
      %40 = arith.addf %39, %38 : vector<16x32xf32>
      %41 = arith.divf %39, %40 : vector<16x32xf32>
      %42 = vector.extract_strided_slice %29 {offsets = [0, 64], sizes = [16, 32], strides = [1, 1]} : vector<16x128xf32> to vector<16x32xf32>
      %43 = math.tanh %42 : vector<16x32xf32>
      %44 = vector.extract_strided_slice %29 {offsets = [0, 96], sizes = [16, 32], strides = [1, 1]} : vector<16x128xf32> to vector<16x32xf32>
      %45 = arith.negf %44 : vector<16x32xf32>
      %46 = math.exp %45 : vector<16x32xf32>
      %cst_26 = arith.constant 1.000000e+00 : f32
      %47 = vector.broadcast %cst_26 : f32 to vector<16x32xf32>
      %48 = arith.addf %47, %46 : vector<16x32xf32>
      %49 = arith.divf %47, %48 : vector<16x32xf32>
      %50 = arith.mulf %41, %arg13 : vector<16x32xf32>
      %51 = arith.mulf %35, %43 : vector<16x32xf32>
      %52 = arith.addf %50, %51 : vector<16x32xf32>
      %53 = math.tanh %52 : vector<16x32xf32>
      %54 = arith.mulf %49, %53 : vector<16x32xf32>
      %55 = arith.addi %5, %arg11 : i32
      %56 = vector.broadcast %55 : i32 to vector<16x1xi32>
      %57 = arith.cmpi eq, %3, %56 : vector<16x1xi32>
      %58 = vector.shape_cast %57 : vector<16x1xi1> to vector<16x1xi1>
      %59 = vector.broadcast %58 : vector<16x1xi1> to vector<16x32xi1>
      %60 = arith.select %59, %54, %arg14 : vector<16x32xi1>, vector<16x32xf32>
      scf.yield %54, %52, %60 : vector<16x32xf32>, vector<16x32xf32>, vector<16x32xf32>
    }
    %c0_14 = arith.constant 0 : index
    %c0_15 = arith.constant 0 : index
    %16 = vector.load %arg8[%c0_14, %c0_15] : memref<16x32xf32, #tpu.memory_space<vmem>>, vector<16x32xf32>
    tpu.vector_store %arg8[%c0_14, %c0_15], %15#0 {strides = array<i32>} : memref<16x32xf32, #tpu.memory_space<vmem>>, vector<16x32xf32>,
    %c0_16 = arith.constant 0 : index
    %c0_17 = arith.constant 0 : index
    %17 = vector.load %arg9[%c0_16, %c0_17] : memref<16x32xf32, #tpu.memory_space<vmem>>, vector<16x32xf32>
    tpu.vector_store %arg9[%c0_16, %c0_17], %15#1 {strides = array<i32>} : memref<16x32xf32, #tpu.memory_space<vmem>>, vector<16x32xf32>,
    %c0_18 = arith.constant 0 : index
    %c0_19 = arith.constant 0 : index
    %18 = vector.load %arg10[%c0_18, %c0_19] : memref<16x32xf32, #tpu.memory_space<vmem>>, vector<16x32xf32>
    tpu.vector_store %arg10[%c0_18, %c0_19], %15#2 {strides = array<i32>} : memref<16x32xf32, #tpu.memory_space<vmem>>, vector<16x32xf32>,
    %c1_i32_20 = arith.constant 1 : i32
    %19 = arith.cmpi eq, %arg1, %c1_i32_20 : i32
    %20 = arith.extui %19 : i1 to i32
    %c0_i32_21 = arith.constant 0 : i32
    %21 = arith.cmpi ne, %20, %c0_i32_21 : i32
    scf.if %21 {
      %c0_22 = arith.constant 0 : index
      %c0_23 = arith.constant 0 : index
      %22 = vector.load %arg10[%c0_22, %c0_23] : memref<16x32xf32, #tpu.memory_space<vmem>>, vector<16x32xf32>
      %c0_24 = arith.constant 0 : index
      %c0_25 = arith.constant 0 : index
      %23 = vector.load %arg7[%c0_24, %c0_25] : memref<16x32xf32, #tpu.memory_space<vmem>>, vector<16x32xf32>
      tpu.vector_store %arg7[%c0_24, %c0_25], %22 {strides = array<i32>} : memref<16x32xf32, #tpu.memory_space<vmem>>, vector<16x32xf32>,
    } else {
    }
    return
  }
  func.func @transform_0(%arg0: i32, %arg1: i32, %arg2: memref<1xi32, #tpu.memory_space<smem>>) -> (i32, i32, i32) {
    %c0_i32 = arith.constant 0 : i32
    %c0_i32_0 = arith.constant 0 : i32
    %c0_i32_1 = arith.constant 0 : i32
    return %arg1, %c0_i32, %c0_i32_0 : i32, i32, i32
  }
  func.func @transform_1(%arg0: i32, %arg1: i32, %arg2: memref<1xi32, #tpu.memory_space<smem>>) -> (i32, i32) {
    %c0_i32 = arith.constant 0 : i32
    %c0_i32_0 = arith.constant 0 : i32
    %c0_i32_1 = arith.constant 0 : i32
    return %c0_i32, %c0_i32_0 : i32, i32
  }
  func.func @transform_2(%arg0: i32, %arg1: i32, %arg2: memref<1xi32, #tpu.memory_space<smem>>) -> (i32, i32) {
    %c0_i32 = arith.constant 0 : i32
    %c0_i32_0 = arith.constant 0 : i32
    return %arg0, %c0_i32 : i32, i32
  }
  func.func @transform_3(%arg0: i32, %arg1: i32, %arg2: memref<1xi32, #tpu.memory_space<smem>>) -> (i32, i32) {
    %c0_i32 = arith.constant 0 : i32
    %c0_i32_0 = arith.constant 0 : i32
    return %arg0, %c0_i32 : i32, i32
  }
  func.func @transform_4(%arg0: i32, %arg1: i32, %arg2: memref<1xi32, #tpu.memory_space<smem>>) -> (i32, i32) {
    %c0_i32 = arith.constant 0 : i32
    %c0_i32_0 = arith.constant 0 : i32
    return %arg0, %c0_i32 : i32, i32
  }
}

</mosaic_0001>

<llo_original>
// kernel: tpu_custom_call.1
$region0: #{tpu_custom_call.1}
  #allocation0 [shape = 'u32[]', space=smem, size = 0x4, offset = 0x4, fixed_abs, tag = 'smem constant byte address 0x4 - core index']
  #allocation1 [shape = 'u32[144,128]{1,0:T(1,128)}', space=vmem, size = 0x12000, scoped, tag = 'internal scratch']
  #allocation2 [shape = 'f32[16,32]{1,0:T(8,128)}', space=vmem, size = 0x2000, scoped, tag = 'scratch operand']
  #allocation3 [shape = 'f32[16,32]{1,0:T(8,128)}', space=vmem, size = 0x2000, scoped, tag = 'scratch operand']
  #allocation4 [shape = 'f32[16,32]{1,0:T(8,128)}', space=vmem, size = 0x2000, scoped, tag = 'scratch operand']
  #allocation5 [shape = 's32[1]{0}', space=sflag, size = 0x4, scoped, tag = 'scoped memory for tpu_custom_call.1']
  #allocation6 [shape = 's32[1]{0:T(128)S(6)}', space=smem, size = 0x200, scoped, tag = 'prefetched SMEM operand 0']
  %s0 = inlined_call_operand.<no memory space> [shape: s32[1], index: 0, kind: input, shape index: {}]
  %s1 = inlined_call_operand.vmem [shape: bf16[8,8,128], index: 1, kind: input, shape index: {}]
  %s2 = inlined_call_operand.hbm [shape: bf16[32,128], index: 2, kind: input, shape index: {}]
  %s3 = inlined_call_operand.vmem [shape: s32[32,1], index: 3, kind: input, shape index: {}]
  %s4 = inlined_call_operand.hbm [shape: f32[32,32], index: 4, kind: input, shape index: {}]
  %s5 = inlined_call_operand.hbm [shape: f32[32,32], index: 5, kind: output, shape index: {}]
  %s6 = sld [smem:[#allocation0]]
  $region72: #{tpu_custom_call.1} parent=0
    _
  %s8 = ssub.s32 1, %s6
  %s9 = scalar_select 0, %s8, %s6
  %10 = sst [smem:[#allocation6]] %s0
  $region1: #{tpu_custom_call.1} parent=0
    #allocation7 [shape = 'u8[8192]{0}', space=vmem, size = 0x2000, scoped, tag = 'input window, operand 2, single buffered']
    #allocation8 [shape = 's32[2]{0}', space=sflag, size = 0x8, scoped, tag = 'scoped memory for tpu_custom_call.1']
    #allocation9 [shape = 's32[2]{0}', space=sflag, size = 0x8, scoped, tag = 'scoped memory for tpu_custom_call.1']
    #allocation10 [shape = 'u8[16384]{0}', space=vmem, size = 0x4000, scoped, tag = 'input window, operand 4']
    #allocation11 [shape = 's32[2]{0}', space=sflag, size = 0x8, scoped, tag = 'scoped memory for tpu_custom_call.1']
    #allocation12 [shape = 'u8[16384]{0}', space=vmem, size = 0x4000, scoped, tag = 'output window, operand 0']
    %11 = vsyncpa [#allocation8], 0
    %12 = vsyncpa [#allocation11], 0
    %s13 = scalar_lea.sflag [#allocation11], 1
    %14 = vsyncpa %s13, 0
    %15 = vsyncpa [#allocation9], 0
    %s16 = scalar_lea.sflag [#allocation9], 1
    %17 = vsyncpa %s16, 0
    loop: start=0, step=1, limit=6
    $region2: #{tpu_custom_call.1} parent=1 // loop_pre_header
      _
    $region3: #{tpu_custom_call.1} parent=1 // loop_header
      %s19 = sphi 0, %s23
      %p20 = scmp.ge.s32.totalorder %s19, 6
      %s26 = sphi 0, %s38
      %s27 = sphi 0, %s34
      %s28 = sphi 0, %s26
      %s29 = sphi 0, %s27
      %s30 = sphi 0, %s28
      %s31 = sphi 0, %s29
      %s41 = sphi 0, %s43
      %s44 = sphi 0, %s41
      %s45 = sphi 0, %s44
      %s61 = sphi 0, %s45
      %s65 = sphi 0, %s65
      %s67 = sphi 0, %s65
      %s68 = sphi 0, %s67
      %s82 = sphi 0, %s68
      %s88 = sphi 0, %s90
      %s91 = sphi 0, %s88
      %s92 = sphi 0, %s91
      %s108 = sphi 0, %s92
      %s114 = sphi 0, %s116
      %s117 = sphi 0, %s114
      %s118 = sphi 0, %s117
      %s134 = sphi 0, %s118
      %s140 = sphi 0, %s142
      %s143 = sphi 0, %s140
      %s144 = sphi 0, %s143
      %s160 = sphi 0, %s144
    $region4: #{tpu_custom_call.1} parent=1 // loop_header_branch
      %22 = sbr.rel (%p20) target = $region8
    $region5: #{tpu_custom_call.1} parent=1 // loop_body
      %s24 = ssub.s32 %s19, 1
      %s25 = ssub.s32 %s19, 2
      %s32 = sadd.s32 1, %s27
      %p33 = scmp.ge.s32.totalorder %s32, 2
      %s34 = scalar_select %p33, 0, %s32
      %s35 = sadd.s32 1, %s26
      %s36 = scalar_select %p33, %s35, %s26
      %p37 = scmp.ge.s32.totalorder %s36, 2
      %s38 = scalar_select %p37, 0, %s36
      %s39 = ssub.s32 %s27, %s34
      %p40 = scmp.eq.s32.totalorder %s39, 0
      %s42 = sadd.s32 %s41, 1
      %s43 = scalar_select %p40, %s41, %s42
      %p46 = pneg %p40
      %p47 = scmp.eq.s32.totalorder %s19, 3
      %p48 = por %p46, %p47
      %p49 = scmp.ne.s32.totalorder %s41, %s44
      %p50 = scmp.eq.s32.totalorder %s19, 0
      %p51 = por %p49, %p50
      %p52 = scmp.ne.s32.totalorder %s41, %s44
      %p53 = scmp.eq.s32.totalorder %s24, 3
      %p54 = por %p52, %p53
      %p55 = scmp.ne.s32.totalorder %s44, %s45
      %p56 = scmp.eq.s32.totalorder %s24, 0
      %p57 = por %p55, %p56
      %p58 = scmp.ne.s32.totalorder %s44, %s45
      %p59 = scmp.eq.s32.totalorder %s25, 3
      %p60 = por %p58, %p59
      %p62 = scmp.ne.s32.totalorder %s45, %s61
      %p63 = scmp.eq.s32.totalorder %s25, 0
      %p64 = por %p62, %p63
      %s66 = sadd.s32 %s65, 1
      %p69 = scmp.eq.s32.totalorder %s19, 3
      %p70 = scmp.ne.s32.totalorder %s65, %s67
      %p71 = scmp.eq.s32.totalorder %s19, 0
      %p72 = por %p70, %p71
      %p73 = scmp.ne.s32.totalorder %s65, %s67
      %p74 = scmp.eq.s32.totalorder %s24, 3
      %p75 = por %p73, %p74
      %p76 = scmp.ne.s32.totalorder %s67, %s68
      %p77 = scmp.eq.s32.totalorder %s24, 0
      %p78 = por %p76, %p77
      %p79 = scmp.ne.s32.totalorder %s67, %s68
      %p80 = scmp.eq.s32.totalorder %s25, 3
      %p81 = por %p79, %p80
      %p83 = scmp.ne.s32.totalorder %s68, %s82
      %p84 = scmp.eq.s32.totalorder %s25, 0
      %p85 = por %p83, %p84
      %s86 = ssub.s32 %s26, %s38
      %p87 = scmp.eq.s32.totalorder %s86, 0
      %s89 = sadd.s32 %s88, 1
      %s90 = scalar_select %p87, %s88, %s89
      %p93 = pneg %p87
      %p94 = scmp.eq.s32.totalorder %s19, 3
      %p95 = por %p93, %p94
      %p96 = scmp.ne.s32.totalorder %s88, %s91
      %p97 = scmp.eq.s32.totalorder %s19, 0
      %p98 = por %p96, %p97
      %p99 = scmp.ne.s32.totalorder %s88, %s91
      %p100 = scmp.eq.s32.totalorder %s24, 3
      %p101 = por %p99, %p100
      %p102 = scmp.ne.s32.totalorder %s91, %s92
      %p103 = scmp.eq.s32.totalorder %s24, 0
      %p104 = por %p102, %p103
      %p105 = scmp.ne.s32.totalorder %s91, %s92
      %p106 = scmp.eq.s32.totalorder %s25, 3
      %p107 = por %p105, %p106
      %p109 = scmp.ne.s32.totalorder %s92, %s108
      %p110 = scmp.eq.s32.totalorder %s25, 0
      %p111 = por %p109, %p110
      %s112 = ssub.s32 %s26, %s38
      %p113 = scmp.eq.s32.totalorder %s112, 0
      %s115 = sadd.s32 %s114, 1
      %s116 = scalar_select %p113, %s114, %s115
      %p119 = pneg %p113
      %p120 = scmp.eq.s32.totalorder %s19, 3
      %p121 = por %p119, %p120
      %p122 = scmp.ne.s32.totalorder %s114, %s117
      %p123 = scmp.eq.s32.totalorder %s19, 0
      %p124 = por %p122, %p123
      %p125 = scmp.ne.s32.totalorder %s114, %s117
      %p126 = scmp.eq.s32.totalorder %s24, 3
      %p127 = por %p125, %p126
      %p128 = scmp.ne.s32.totalorder %s117, %s118
      %p129 = scmp.eq.s32.totalorder %s24, 0
      %p130 = por %p128, %p129
      %p131 = scmp.ne.s32.totalorder %s117, %s118
      %p132 = scmp.eq.s32.totalorder %s25, 3
      %p133 = por %p131, %p132
      %p135 = scmp.ne.s32.totalorder %s118, %s134
      %p136 = scmp.eq.s32.totalorder %s25, 0
      %p137 = por %p135, %p136
      %s138 = ssub.s32 %s26, %s38
      %p139 = scmp.eq.s32.totalorder %s138, 0
      %s141 = sadd.s32 %s140, 1
      %s142 = scalar_select %p139, %s140, %s141
      %p145 = pneg %p139
      %p146 = scmp.eq.s32.totalorder %s19, 3
      %p147 = por %p145, %p146
      %p148 = scmp.ne.s32.totalorder %s140, %s143
      %p149 = scmp.eq.s32.totalorder %s19, 0
      %p150 = por %p148, %p149
      %p151 = scmp.ne.s32.totalorder %s140, %s143
      %p152 = scmp.eq.s32.totalorder %s24, 3
      %p153 = por %p151, %p152
      %p154 = scmp.ne.s32.totalorder %s143, %s144
      %p155 = scmp.eq.s32.totalorder %s24, 0
      %p156 = por %p154, %p155
      %p157 = scmp.ne.s32.totalorder %s143, %s144
      %p158 = scmp.eq.s32.totalorder %s25, 3
      %p159 = por %p157, %p158
      %p161 = scmp.ne.s32.totalorder %s144, %s160
      %p162 = scmp.eq.s32.totalorder %s25, 0
      %p163 = por %p161, %p162
      %p164 = scmp.le.s32.totalorder 1, %s19
      %p165 = scmp.lt.s32.totalorder %s19, 5
      %p166 = pnand %p164, %p165
      %p167 = pneg %p166
      // Predicated region
      $region9: #{tpu_custom_call.1} parent=5 // pred_check
        _
      $region10: #{tpu_custom_call.1} parent=5 // pred_check_branch
        %169 = sbr.rel (%p166) target = $region12
      $region11: #{tpu_custom_call.1} parent=5 // pred_region
        %s170 = ssub.s32 %s19, 1
        // Predicated region
        $region13: #{tpu_custom_call.1} parent=11 // pred_check
          %p171 = pneg %p78
        $region14: #{tpu_custom_call.1} parent=11 // pred_check_branch
          %173 = sbr.rel (%p171) target = $region16
        $region15: #{tpu_custom_call.1} parent=11 // pred_region
          %s175 = ssub.s32 256, 256
          %176 = vsyncadd [#allocation8], %s175
          %s177 = sshll.u32 [#allocation7], 4
          %s178 = int_to_ptr.vmem [resolvable:$true] %s177
          %183 = dma.hbm_to_vmem [thread:$0]  %s2, 256, %s178, [#allocation8], 64, 64, 4
        $region16: #{tpu_custom_call.1} parent=11 // pred_fallthru
          _
      $region12: #{tpu_custom_call.1} parent=5 // pred_fallthru
        _
      %p184 = scmp.lt.s32.totalorder %s19, 4
      // Predicated region
      $region17: #{tpu_custom_call.1} parent=5 // pred_check
        %p185 = pneg %p184
      $region18: #{tpu_custom_call.1} parent=5 // pred_check_branch
        %187 = sbr.rel (%p185) target = $region20
      $region19: #{tpu_custom_call.1} parent=5 // pred_region
        // Predicated region
        $region21: #{tpu_custom_call.1} parent=19 // pred_check
          %p188 = pneg %p51
        $region22: #{tpu_custom_call.1} parent=19 // pred_check_branch
          %190 = sbr.rel (%p188) target = $region24
        $region23: #{tpu_custom_call.1} parent=19 // pred_region
          %s191 = smul.u32 4, %s27
          %p192 = scmp.lt.s32.totalorder %s191, 7
          %s193 = scalar_select %p192, %s191, 7
          %s194 = smul.addr %s193, 4
          %s195 = scalar_lea.vmem %s1, %s194
          %s196 = smul.u32 4, %s27
        $region24: #{tpu_custom_call.1} parent=19 // pred_fallthru
          _
        // Predicated region
        $region25: #{tpu_custom_call.1} parent=19 // pred_check
          %p197 = pneg %p98
        $region26: #{tpu_custom_call.1} parent=19 // pred_check_branch
          %199 = sbr.rel (%p197) target = $region28
        $region27: #{tpu_custom_call.1} parent=19 // pred_region
          %s200 = smul.u32 2, %s26
          %p201 = scmp.lt.s32.totalorder %s200, 3
          %s202 = scalar_select %p201, %s200, 3
          %s203 = smul.addr %s202, 8
          %s204 = scalar_lea.vmem %s3, %s203
          %s205 = smul.u32 2, %s26
        $region28: #{tpu_custom_call.1} parent=19 // pred_fallthru
          _
        // Predicated region
        $region29: #{tpu_custom_call.1} parent=19 // pred_check
          %p206 = pneg %p124
        $region30: #{tpu_custom_call.1} parent=19 // pred_check_branch
          %208 = sbr.rel (%p206) target = $region32
        $region31: #{tpu_custom_call.1} parent=19 // pred_region
          %s209 = sand.u32 %s114, 1
          %s210 = scalar_lea.sflag [#allocation11], %s209
          %s211 = sand.u32 %s114, 1
          %s212 = smul.addr %s211, 16
          %s213 = scalar_lea.vmem [#allocation10], %s212
          %s214 = smul.u32 2, %s26
          %s216 = ssub.s32 256, 256
          %217 = vsyncadd %s210, %s216
          %s218 = smul.addr %s214, 128
          %s219 = scalar_lea.hbm %s4, %s218
          %s220 = sshll.u32 %s213, 4
          %s221 = int_to_ptr.vmem [resolvable:$true] %s220
          %226 = dma.hbm_to_vmem [thread:$0]  %s219, 256, %s221, %s210, 128, 128, 8
        $region32: #{tpu_custom_call.1} parent=19 // pred_fallthru
          _
      $region20: #{tpu_custom_call.1} parent=5 // pred_fallthru
        _
      %p227 = scmp.le.s32.totalorder 1, %s19
      %p228 = scmp.lt.s32.totalorder %s19, 5
      %p229 = pnand %p227, %p228
      %p230 = pneg %p229
      // Predicated region
      $region33: #{tpu_custom_call.1} parent=5 // pred_check
        _
      $region34: #{tpu_custom_call.1} parent=5 // pred_check_branch
        %232 = sbr.rel (%p229) target = $region36
      $region35: #{tpu_custom_call.1} parent=5 // pred_region
        %s233 = ssub.s32 %s19, 1
        // Predicated region
        $region37: #{tpu_custom_call.1} parent=35 // pred_check
          %p234 = pneg %p78
        $region38: #{tpu_custom_call.1} parent=35 // pred_check_branch
          %236 = sbr.rel (%p234) target = $region40
        $region39: #{tpu_custom_call.1} parent=35 // pred_region
          %237 = dma.done [#allocation8], 256
        $region40: #{tpu_custom_call.1} parent=35 // pred_fallthru
          _
        %s238 = sand.u32 %s117, 1
        %s239 = scalar_lea.sflag [#allocation11], %s238
        %s240 = sand.u32 %s117, 1
        %s241 = smul.addr %s240, 16
        %s242 = scalar_lea.vmem [#allocation10], %s241
        // Predicated region
        $region41: #{tpu_custom_call.1} parent=35 // pred_check
          %p243 = pneg %p130
        $region42: #{tpu_custom_call.1} parent=35 // pred_check_branch
          %245 = sbr.rel (%p243) target = $region44
        $region43: #{tpu_custom_call.1} parent=35 // pred_region
          %246 = dma.done %s239, 256
        $region44: #{tpu_custom_call.1} parent=35 // pred_fallthru
          _
        %s247 = smul.u32 4, %s29
        %p248 = scmp.lt.s32.totalorder %s247, 7
        %s249 = scalar_select %p248, %s247, 7
        %s250 = smul.addr %s249, 4
        %s251 = scalar_lea.vmem %s1, %s250
        %p252 = pneg %p57
        %p253 = pneg %p54
        %p254 = pneg %p78
        %p255 = pneg %p75
        %s256 = smul.u32 2, %s28
        %p257 = scmp.lt.s32.totalorder %s256, 3
        %s258 = scalar_select %p257, %s256, 3
        %s259 = smul.addr %s258, 8
        %s260 = scalar_lea.vmem %s3, %s259
        %p261 = pneg %p104
        %p262 = pneg %p101
        %s263 = sand.u32 %s117, 1
        %s264 = scalar_lea.sflag [#allocation11], %s263
        %s265 = sand.u32 %s117, 1
        %s266 = smul.addr %s265, 16
        %s267 = scalar_lea.vmem [#allocation10], %s266
        %p268 = pneg %p130
        %p269 = pneg %p127
        %p270 = pneg %p156
        %p271 = pneg %p153
        %s272 = sand.u32 %s143, 1
        %s273 = scalar_lea.sflag [#allocation9], %s272
        %s274 = sand.u32 %s143, 1
        %s275 = smul.addr %s274, 16
        %s276 = scalar_lea.vmem [#allocation12], %s275
        %s277 = smul.u32 4, %s29
        %p278 = scmp.lt.s32.totalorder %s277, 7
        %s279 = scalar_select %p278, %s277, 7
        %s280 = smul.addr %s279, 4
        %s281 = scalar_lea.vmem %s1, %s280
        %s282 = smul.u32 4, %s29
        %s283 = smul.u32 2, %s28
        %p284 = scmp.lt.s32.totalorder %s283, 3
        %s285 = scalar_select %p284, %s283, 3
        %s286 = smul.addr %s285, 8
        %s287 = scalar_lea.vmem %s3, %s286
        %s288 = smul.u32 2, %s28
        %s289 = smul.u32 2, %s28
        %s290 = smul.u32 2, %s28
        %p292 = scmp.eq.s32.totalorder %s29, 0
        // Predicated region
        $region45: #{tpu_custom_call.1} parent=35 // pred_check
          %p293 = pneg %p292
        $region46: #{tpu_custom_call.1} parent=35 // pred_check_branch
          %295 = sbr.rel (%p293) target = $region48
        $region47: #{tpu_custom_call.1} parent=35 // pred_region
          %v296 = vld [vmem:[%s242] sm:$0xff]
          %v297 = vld [vmem:[%s242 + $0x8] sm:$0xff]
          %vm298 = vcmask 261120
          %299 = vst.msk [vmem:[#allocation2] sm:$0xff] %vm298, %v296
          %300 = vst.msk [vmem:[#allocation2 + $0x8] sm:$0xff] %vm298, %v297
          %v301 = vld [vmem:[%s242] sm:$0xff]
          %v302 = vld [vmem:[%s242 + $0x8] sm:$0xff]
          %303 = vst.msk [vmem:[#allocation3] sm:$0xff] %vm298, %v301
          %304 = vst.msk [vmem:[#allocation3 + $0x8] sm:$0xff] %vm298, %v302
          %305 = vst.msk [vmem:[#allocation4] sm:$0xff] %vm298, 0.0
          %306 = vst.msk [vmem:[#allocation4 + $0x8] sm:$0xff] %vm298, 0.0
        $region48: #{tpu_custom_call.1} parent=35 // pred_fallthru
          _
        %v307 = vld [vmem:[%s287] sm:$0xff]
        %v308 = vld [vmem:[%s287 + $0x8] sm:$0xff]
        %v309 = vld [vmem:[#allocation7] sm:$0xf]
        %v310 = vld [vmem:[#allocation7 + $0x4] sm:$0xf]
        %v311 = vld [vmem:[#allocation7 + $0x8] sm:$0xf]
        %v312 = vld [vmem:[#allocation7 + $0xc] sm:$0xf]
        %s313 = smul.u32 %s29, 4
        %s314 = sld [smem:[#allocation6]]
        %s315 = ssub.s32 %s314, %s313
        %p316 = scmp.gt.s32.totalorder %s315, 0
        %s317 = scalar_select %p316, %s315, 0
        %p318 = scmp.lt.s32.totalorder %s317, 4
        %s319 = scalar_select %p318, %s317, 4
        %v320 = vld [vmem:[#allocation2] sm:$0xff]
        %v321 = vld [vmem:[#allocation2 + $0x8] sm:$0xff]
        %v322 = vld [vmem:[#allocation3] sm:$0xff]
        %v323 = vld [vmem:[#allocation3 + $0x8] sm:$0xff]
        %v324 = vld [vmem:[#allocation4] sm:$0xff]
        %v325 = vld [vmem:[#allocation4 + $0x8] sm:$0xff]
        // While loop
        $region49: #{tpu_custom_call.1} parent=35 // loop_pre_header
          _
        $region50: #{tpu_custom_call.1} parent=35 // loop_header
          %s327 = sphi 0, %s329
          %p328 = scmp.ge.s32.totalorder %s327, %s319
          %v332 = vphi %v320, %v485
          %v333 = vphi %v321, %v487
          %v334 = vphi %v322, %v493
          %v335 = vphi %v323, %v495
          %v336 = vphi %v324, %v501
          %v337 = vphi %v325, %v503
        $region51: #{tpu_custom_call.1} parent=35 // loop_header_branch
          %331 = sbr.rel (%p328) target = $region55
        $region52: #{tpu_custom_call.1} parent=35 // loop_body
          %s338 = smul.addr %s327, 4
          %s339 = scalar_lea.vmem %s281, %s338
          %v340 = vld [vmem:[%s339] sm:$0xf]
          %v341 = vunpack.c.l.bf16 %v340
          %v342 = vpack.c.bf16 %v333, %v332
          %v347 = vunpack.c.l.b16 %v309
          %v348 = vunpack.c.l.b16 %v310
          %v349 = vunpack.c.l.b16 %v311
          %v350 = vunpack.c.l.b16 %v312
          %v351 = vpack.c.b16 %v348, %v347
          %v352 = vpack.c.b16 %v350, %v349
          %vm355 = vcmask 261120
          %v357 = vsel %vm355, %v342, 0
          %359 = vmatprep.subr.bf16.mxu0 0
          %360 = vmatpush1.bf16.msra.mxu0 %v351
          %361 = vmatprep.subr.bf16.mxu0 0
          %362 = vmatpush1.bf16.msra.mxu0 %v352
          %363 = vmatprep.subr.bf16.mxu0 0
          %364 = vmatpush1.bf16.msra.mxu0 0
          %365 = vmatprep.subr.bf16.mxu0 0
          %366 = vmatpush1.bf16.msra.mxu0 0
          %367 = vmatprep.subr.bf16.mxu0 0
          %368 = vmatpush1.bf16.msra.mxu0 0
          %369 = vmatprep.subr.bf16.mxu0 0
          %370 = vmatpush1.bf16.msra.mxu0 0
          %371 = vmatprep.subr.bf16.mxu0 0
          %372 = vmatpush1.bf16.msra.mxu0 0
          %373 = vmatprep.subr.bf16.mxu0 0
          %374 = vmatpush1.bf16.msra.mxu0 0
          %375 = vmatprep.subr.bf16.mxu0 0
          %376 = vmatpush1.bf16.msra.mxu0 0
          %377 = vmatprep.subr.bf16.mxu0 0
          %378 = vmatpush1.bf16.msra.mxu0 0
          %379 = vmatprep.subr.bf16.mxu0 0
          %380 = vmatpush1.bf16.msra.mxu0 0
          %381 = vmatprep.subr.bf16.mxu0 0
          %382 = vmatpush1.bf16.msra.mxu0 0
          %383 = vmatprep.subr.bf16.mxu0 0
          %384 = vmatpush1.bf16.msra.mxu0 0
          %385 = vmatprep.subr.bf16.mxu0 0
          %386 = vmatpush1.bf16.msra.mxu0 0
          %387 = vmatprep.subr.bf16.mxu0 0
          %388 = vmatpush1.bf16.msra.mxu0 0
          %389 = vmatprep.subr.bf16.mxu0 0
          %390 = vmatpush1.bf16.msra.mxu0 0
          %391 = vmatprep.mubr.bf16.mxu0 0
          %392 = vmatmul.mubr.bf16.gmra.mrb[0].mxu0 %v357
          %v393 = vpop.f32.mrb[0].mxu0
          %v394 = vadd.f32 0.0, %v393
          %v395 = vpop.f32.mrb[0].mxu0
          %v396 = vpop.f32.mrb[0].mxu0
          %v397 = vadd.f32 0.0, %v396
          %v398 = vpop.f32.mrb[0].mxu0
          %399 = vdwg.mxu0
          %v400 = vadd.f32 %v341, %v394
          %v401 = vadd.f32 %v341, %v397
          %v402 = vxor.u32 %v400, 2147483648
          %v403 = vxor.u32 %v401, 2147483648
          %v404 = vmul.f32 %v402, 1.442695
          %v405 = vpow.pop %v404
          %v406 = vmul.f32 %v403, 1.442695
          %v407 = vpow.pop %v406
          %v408 = vadd.f32 %v405, 1.0
          %v409 = vadd.f32 %v407, 1.0
          %v410 = vrcp.pop %v408
          %v411 = vmul.f32 1.0, %v410
          %v412 = vrcp.pop %v409
          %v413 = vmul.f32 1.0, %v412
          %v414 = vtanh.pop %v400
          %v415 = vtanh.pop %v401
          %418 = vrot.lane.b32.xlu0 %v334, 32
          %v419 = vpop.permute.xlu0 %418
          %420 = vrot.lane.b32.xlu0 %v335, 32
          %v421 = vpop.permute.xlu0 %420
          %v424 = vmul.f32 %v411, %v419
          %v425 = vmul.f32 %v413, %v421
          %428 = vrot.lane.b32.xlu0 %v414, 64
          %v429 = vpop.permute.xlu0 %428
          %430 = vrot.lane.b32.xlu0 %v415, 64
          %v431 = vpop.permute.xlu0 %430
          %v434 = vmul.f32 %v411, %v429
          %v435 = vmul.f32 %v413, %v431
          %438 = vrot.lane.b32.xlu0 %v434, 32
          %v439 = vpop.permute.xlu0 %438
          %440 = vrot.lane.b32.xlu0 %v435, 32
          %v441 = vpop.permute.xlu0 %440
          %v444 = vadd.f32 %v424, %v439
          %v445 = vadd.f32 %v425, %v441
          %v446 = vtanh.pop %v444
          %v447 = vtanh.pop %v445
          %450 = vrot.lane.b32.xlu0 %v446, 64
          %v451 = vpop.permute.xlu0 %450
          %452 = vrot.lane.b32.xlu0 %v447, 64
          %v453 = vpop.permute.xlu0 %452
          %v456 = vmul.f32 %v411, %v451
          %v457 = vmul.f32 %v413, %v453
          %s458 = sadd.s32 %s313, %s327
          %v459 = vstv %s458
          %vm460 = vcmp.eq.s32.totalorder %v307, %v459
          %vm461 = vcmp.eq.s32.totalorder %v308, %v459
          %v462 = vsel %vm460, 1, 0
          %v463 = vsel %vm461, 1, 0
          %464 = vset.pattern.permute.xlu0 0
          %465 = vperm.xlu0 %464, %v462
          %v466 = vpop.permute.xlu0 %465
          %467 = vset.pattern.permute.xlu0 0
          %468 = vperm.xlu0 %467, %v463
          %v469 = vpop.permute.xlu0 %468
          %vm470 = vcmp.eq.s32.totalorder %v466, 1
          %vm471 = vcmp.eq.s32.totalorder %v469, 1
          %474 = vrot.lane.b32.xlu0 %v336, 96
          %v475 = vpop.permute.xlu0 %474
          %476 = vrot.lane.b32.xlu0 %v337, 96
          %v477 = vpop.permute.xlu0 %476
          %v480 = vsel %vm470, %v456, %v475
          %v481 = vsel %vm471, %v457, %v477
          %484 = vrot.lane.b32.xlu0 %v456, 32
          %v485 = vpop.permute.xlu0 %484
          %486 = vrot.lane.b32.xlu0 %v457, 32
          %v487 = vpop.permute.xlu0 %486
          %492 = vrot.lane.b32.xlu0 %v444, 96
          %v493 = vpop.permute.xlu0 %492
          %494 = vrot.lane.b32.xlu0 %v445, 96
          %v495 = vpop.permute.xlu0 %494
          %500 = vrot.lane.b32.xlu0 %v480, 32
          %v501 = vpop.permute.xlu0 %500
          %502 = vrot.lane.b32.xlu0 %v481, 32
          %v503 = vpop.permute.xlu0 %502
        $region53: #{tpu_custom_call.1} parent=35 // loop_footer
          %s329 = sadd.s32 %s327, 1
        $region54: #{tpu_custom_call.1} parent=35 // loop_footer_branch
          %326 = sbr.rel target = $region50
        $region55: #{tpu_custom_call.1} parent=35 // loop_exit
          _
        %vm506 = vcmask 261120
        %507 = vst.msk [vmem:[#allocation2] sm:$0xff] %vm506, %v332
        %508 = vst.msk [vmem:[#allocation2 + $0x8] sm:$0xff] %vm506, %v333
        %509 = vst.msk [vmem:[#allocation3] sm:$0xff] %vm506, %v334
        %510 = vst.msk [vmem:[#allocation3 + $0x8] sm:$0xff] %vm506, %v335
        %511 = vst.msk [vmem:[#allocation4] sm:$0xff] %vm506, %v336
        %512 = vst.msk [vmem:[#allocation4 + $0x8] sm:$0xff] %vm506, %v337
        %p513 = scmp.eq.s32.totalorder %s29, 1
        // Predicated region
        $region56: #{tpu_custom_call.1} parent=35 // pred_check
          %p514 = pneg %p513
        $region57: #{tpu_custom_call.1} parent=35 // pred_check_branch
          %516 = sbr.rel (%p514) target = $region59
        $region58: #{tpu_custom_call.1} parent=35 // pred_region
          %v517 = vld [vmem:[#allocation4] sm:$0xff]
          %v518 = vld [vmem:[#allocation4 + $0x8] sm:$0xff]
          %519 = vst.msk [vmem:[%s276] sm:$0xff] %vm506, %v517
          %520 = vst.msk [vmem:[%s276 + $0x8] sm:$0xff] %vm506, %v518
        $region59: #{tpu_custom_call.1} parent=35 // pred_fallthru
          _
        %s521 = sand.u32 %s143, 1
        %s522 = scalar_lea.sflag [#allocation9], %s521
        %s523 = sand.u32 %s143, 1
        %s524 = smul.addr %s523, 16
        %s525 = scalar_lea.vmem [#allocation12], %s524
        // Predicated region
        $region60: #{tpu_custom_call.1} parent=35 // pred_check
          %p526 = pneg %p153
        $region61: #{tpu_custom_call.1} parent=35 // pred_check_branch
          %528 = sbr.rel (%p526) target = $region63
        $region62: #{tpu_custom_call.1} parent=35 // pred_region
          %s529 = smul.u32 2, %s28
          %s531 = ssub.s32 256, 256
          %532 = vsyncadd %s522, %s531
          %s533 = smul.addr %s529, 128
          %s534 = scalar_lea.hbm %s5, %s533
          %s535 = sshll.u32 %s525, 4
          %s536 = int_to_ptr.vmem [resolvable:$true] %s535
          %541 = dma.vmem_to_hbm [thread:$0]  %s536, 256, %s534, %s522, 128, 128, 8
        $region63: #{tpu_custom_call.1} parent=35 // pred_fallthru
          _
      $region36: #{tpu_custom_call.1} parent=5 // pred_fallthru
        _
      %p542 = scmp.le.s32.totalorder 2, %s19
      // Predicated region
      $region64: #{tpu_custom_call.1} parent=5 // pred_check
        %p543 = pneg %p542
      $region65: #{tpu_custom_call.1} parent=5 // pred_check_branch
        %545 = sbr.rel (%p543) target = $region67
      $region66: #{tpu_custom_call.1} parent=5 // pred_region
        %s546 = ssub.s32 %s19, 2
        // Predicated region
        $region68: #{tpu_custom_call.1} parent=66 // pred_check
          %p547 = pneg %p159
        $region69: #{tpu_custom_call.1} parent=66 // pred_check_branch
          %549 = sbr.rel (%p547) target = $region71
        $region70: #{tpu_custom_call.1} parent=66 // pred_region
          %s550 = sand.u32 %s144, 1
          %s551 = scalar_lea.sflag [#allocation9], %s550
          %s552 = sand.u32 %s144, 1
          %s553 = smul.addr %s552, 16
          %s554 = scalar_lea.vmem [#allocation12], %s553
          %555 = dma.done %s551, 256
        $region71: #{tpu_custom_call.1} parent=66 // pred_fallthru
          _
      $region67: #{tpu_custom_call.1} parent=5 // pred_fallthru
        _
    $region6: #{tpu_custom_call.1} parent=1 // loop_footer
      %s23 = sadd.s32 1, %s19
    $region7: #{tpu_custom_call.1} parent=1 // loop_footer_branch
      %18 = sbr.rel target = $region3
    $region8: #{tpu_custom_call.1} parent=1 // loop_exit
      _
    %556 = vsyncpa [#allocation8], 1
    %s557 = scalar_lea.sflag [#allocation8], 1
    %558 = vsyncpa %s557, 1
    %559 = vsyncpa [#allocation11], 1
    %s560 = scalar_lea.sflag [#allocation11], 1
    %561 = vsyncpa %s560, 1
    %562 = vsyncpa [#allocation9], 1
    %s563 = scalar_lea.sflag [#allocation9], 1
    %564 = vsyncpa %s563, 1

</llo_original>
